<compile_context>
chip_gen: v7x
topology: tpu7x:2x2x1
jax: 0.10.0
libtpu: 0.0.40
codegen_flags: <defaults>
</compile_context>

<pallas_src>
import functools

import jax
import jax.numpy as jnp
from jax import lax
from jax.experimental import pallas as pl
from jax.experimental.pallas import tpu as pltpu

# --- "neox_args" compile-time configuration -------------------------------
MUP_RP_EMBEDDING_MULT = 1.0     # neox_args.mup_rp_embedding_mult
USE_MUP = False                 # neox_args.use_mup
MUP_EMBEDDING_MULT = 1.0        # neox_args.mup_embedding_mult
EMBEDDING_DROPOUT_PROB = 0.0    # identity dropout (eval / p=0)
# TODO(synk): non-zero training-mode dropout would use pltpu.prng_seed +
#             pltpu.prng_random_bits inside the kernel; omitted since p=0.0.

_FETCH_UNROLL = 8               # unroll factor for the DMA-descriptor issue loop


# ---------------------------------------------------------------------------
# Shared in-kernel helpers
# ---------------------------------------------------------------------------
def _scale_and_combine(words_f32, poss_f32, out_dtype):
    """Fold the module's multipliers at trace time, add, cast to output dtype."""
    if MUP_RP_EMBEDDING_MULT != 1.0:
        poss_f32 = poss_f32 * MUP_RP_EMBEDDING_MULT
    emb = words_f32 + poss_f32
    # dropout(p=0.0) is the identity.
    if USE_MUP and MUP_EMBEDDING_MULT != 1.0:
        emb = emb * MUP_EMBEDDING_MULT
    return emb.astype(out_dtype)


def _one_hot_rows(idx_col, num_rows, table):
    """Gather table[idx] for a (T, 1) int32 column of indices.

    Uses a one-hot MXU matmul (broadcasted iota + compare + dot), which is
    fully supported by Mosaic and avoids both per-row DMA descriptors and
    in-kernel dynamic-gather ops.  Result is f32-accumulated.
    """
    T = idx_col.shape[0]
    one_hot = (lax.broadcasted_iota(jnp.int32, (T, num_rows), 1)
               == idx_col).astype(table.dtype)
    return jnp.dot(one_hot, table, preferred_element_type=jnp.float32)


# ---------------------------------------------------------------------------
# Kernel 1: small-table fast path — both tables VMEM-resident, no manual DMA.
# ---------------------------------------------------------------------------
def _resident_kernel(ids_ref, pos_ids_ref, word_ref, pos_ref, out_ref):
    # ids_ref / pos_ids_ref: (T, 1) int32 VMEM blocks.
    # word_ref (V, H) / pos_ref (P, H): full tables, resident across the grid.
    words = _one_hot_rows(ids_ref[...], word_ref.shape[0], word_ref[...])
    poss = _one_hot_rows(pos_ids_ref[...], pos_ref.shape[0], pos_ref[...])
    out_ref[...] = _scale_and_combine(words, poss, out_ref.dtype)


# ---------------------------------------------------------------------------
# Kernel 2: large vocab — word rows DMA-gathered from HBM (double-buffered),
#           position table copied once into VMEM and gathered via one-hot MXU.
# ---------------------------------------------------------------------------
def _gather_kernel(ids_ref,        # SMEM scalar prefetch: (n_pad,) int32 token ids
                   word_hbm,       # HBM ref (pl.ANY): (V, H) word table
                   pos_hbm,        # HBM ref (pl.ANY): (P, H) position table
                   pos_ids_ref,    # VMEM block: (T, 1) int32 position ids
                   out_ref,        # VMEM output block: (T, H)
                   word_buf,       # VMEM scratch: (2, T, H) gathered word rows
                   pos_tbl,        # VMEM scratch: (P, H) resident position table
                   word_sem,       # DMA semaphores: (2,)
                   tbl_sem,        # DMA semaphore:  (1,) one-shot pos-table copy
                   *, tokens_per_tile):
    t = pl.program_id(0)
    num_tiles = pl.num_programs(0)
    T = tokens_per_tile

    def fetch_tile(tile_idx, slot):
        base = tile_idx * T

        def issue(j, carry):
            tok = ids_ref[base + j]
            pltpu.make_async_copy(
                word_hbm.at[pl.ds(tok, 1)],
                word_buf.at[slot, pl.ds(j, 1)],
                word_sem.at[slot],
            ).start()
            return carry

        # Unrolled so SMEM id loads + address math + descriptor pushes from
        # consecutive rows pack into the same VLIW bundles (descriptor issue
        # is the binding slot for this kernel).
        lax.fori_loop(0, T, issue, 0, unroll=_FETCH_UNROLL)

    def wait_tile(slot):
        # All T row copies of a tile signal the same per-slot semaphore; one
        # wait sized as the full (T, H) slot consumes them all (byte-count
        # semantics).  Ids are padded to whole tiles so every tile issues
        # exactly T row DMAs, keeping this wait exact on the last tile too.
        pltpu.make_async_copy(word_buf.at[slot], word_buf.at[slot],
                              word_sem.at[slot]).wait()

    cur = t % 2
    nxt = (t + 1) % 2

    # Prime the pipeline: copy the position table into VMEM once (reused by
    # every tile -> no per-token position DMAs) and start tile 0's row gather.
    @pl.when(t == 0)
    def _():
        tbl_cp = pltpu.make_async_copy(pos_hbm, pos_tbl, tbl_sem.at[0])
        tbl_cp.start()
        fetch_tile(0, 0)
        tbl_cp.wait()

    # Issue the gather for the next tile before consuming the current one so
    # the many small row DMAs stay in flight behind this step's wait/compute.
    @pl.when(t + 1 < num_tiles)
    def _():
        fetch_tile(t + 1, nxt)

    # Position gather (MXU) does not depend on the in-flight word DMAs.
    poss = _one_hot_rows(pos_ids_ref[...], pos_tbl.shape[0], pos_tbl[...])

    wait_tile(cur)
    words = word_buf[cur].astype(jnp.float32)
    out_ref[...] = _scale_and_combine(words, poss, out_ref.dtype)


# ---------------------------------------------------------------------------
# Kernel 3: fallback for position tables too large for VMEM — both tables
#           gathered row-by-row from HBM (previous revision's structure).
# ---------------------------------------------------------------------------
def _gather_pos_dma_kernel(ids_ref, pos_ids_ref, word_hbm, pos_hbm, out_ref,
                           word_buf, pos_buf, word_sem, pos_sem,
                           *, tokens_per_tile):
    t = pl.program_id(0)
    num_tiles = pl.num_programs(0)
    T = tokens_per_tile

    def fetch_tile(tile_idx, slot):
        base = tile_idx * T

        def issue(j, carry):
            tok = ids_ref[base + j]
            pos = pos_ids_ref[base + j]
            pltpu.make_async_copy(word_hbm.at[pl.ds(tok, 1)],
                                  word_buf.at[slot, pl.ds(j, 1)],
                                  word_sem.at[slot]).start()
            pltpu.make_async_copy(pos_hbm.at[pl.ds(pos, 1)],
                                  pos_buf.at[slot, pl.ds(j, 1)],
                                  pos_sem.at[slot]).start()
            return carry

        lax.fori_loop(0, T, issue, 0, unroll=_FETCH_UNROLL)

    def wait_tile(slot):
        pltpu.make_async_copy(word_buf.at[slot], word_buf.at[slot],
                              word_sem.at[slot]).wait()
        pltpu.make_async_copy(pos_buf.at[slot], pos_buf.at[slot],
                              pos_sem.at[slot]).wait()

    cur = t % 2
    nxt = (t + 1) % 2

    @pl.when(t == 0)
    def _():
        fetch_tile(0, 0)

    @pl.when(t + 1 < num_tiles)
    def _():
        fetch_tile(t + 1, nxt)

    wait_tile(cur)
    words = word_buf[cur].astype(jnp.float32)
    poss = pos_buf[cur].astype(jnp.float32)
    out_ref[...] = _scale_and_combine(words, poss, out_ref.dtype)


# ---------------------------------------------------------------------------
# Host-side wrapper
# ---------------------------------------------------------------------------
def _vmem_capacity_bytes():
    """Per-TensorCore VMEM (v5e/v6e: 128 MiB, v7x: 64 MiB); conservative fallback."""
    try:
        cap = int(pltpu.get_tpu_info().vmem_capacity_bytes)
        if cap > 0:
            return cap
    except Exception:
        pass
    return 64 * 1024 * 1024


def _vmem_limit(est_bytes, cap_bytes):
    return int(min(cap_bytes, max(32 * 1024 * 1024, int(1.3 * est_bytes))))


def _pick_tile_tokens(n_tok, max_tokens, per_token_bytes, avail_bytes):
    """Largest multiple of 32 <= max_tokens fitting the budget; prefer a divisor
    of n_tok so there is no partial (masked) trailing output block."""
    t = min(max_tokens, max(n_tok, 32))
    t = max(32, (t // 32) * 32)
    while t > 32 and t * per_token_bytes > avail_bytes:
        t -= 32
    if n_tok % t != 0:
        for cand in range(t, 31, -32):
            if n_tok % cand == 0:
                t = cand
                break
    return t


def embedding_forward(input_ids, position_ids, word_emb, pos_emb,
                      *, tokens_per_tile=512):
    """input_ids, position_ids: [B, S] int; word_emb: [V, H]; pos_emb: [P, H]."""
    B, S = input_ids.shape
    V, H = word_emb.shape
    P, _ = pos_emb.shape
    n_tok = B * S
    out_dtype = word_emb.dtype

    w_it = jnp.dtype(word_emb.dtype).itemsize
    p_it = jnp.dtype(pos_emb.dtype).itemsize
    o_it = jnp.dtype(out_dtype).itemsize

    vmem_cap = _vmem_capacity_bytes()
    budget = int(0.70 * vmem_cap)   # headroom for Mosaic temporaries / double buffers

    # Clamp ids so an out-of-range id can never drive a DMA outside the tables
    # (DMA-only bounds checking would fault, not clamp).
    ids_flat = jnp.clip(input_ids.reshape(-1).astype(jnp.int32), 0, V - 1)
    pos_flat = jnp.clip(position_ids.reshape(-1).astype(jnp.int32), 0, P - 1)

    # ---- path selection ---------------------------------------------------
    word_tbl_bytes = V * H * w_it
    pos_tbl_bytes = P * H * p_it
    resident_tbl_bytes = 2 * (word_tbl_bytes + pos_tbl_bytes)   # x2: BlockSpec buffering
    fast_per_tok = 2 * H * o_it + 4 * (V + P) + 16
    fast_path = (V <= 2048 and P <= 4096
                 and resident_tbl_bytes + 32 * fast_per_tok <= budget)

    gather_per_tok = 2 * H * (w_it + o_it) + 2 * 4 + 4 * P
    pos_resident = (P <= 8192
                    and pos_tbl_bytes + 32 * gather_per_tok <= budget)

    if fast_path:
        per_tok, avail = fast_per_tok, budget - resident_tbl_bytes
    elif pos_resident:
        per_tok, avail = gather_per_tok, budget - pos_tbl_bytes
    else:
        per_tok, avail = 2 * H * (w_it + p_it + o_it) + 8, budget
    T = _pick_tile_tokens(n_tok, tokens_per_tile, per_tok, avail)

    n_pad = pl.cdiv(n_tok, T) * T
    num_tiles = n_pad // T

    # Keep ids padded to whole tiles: the gather kernels rely on exactly T row
    # DMAs per tile (byte-count semaphore wait).  The trailing partial output
    # block (if any) is masked by Pallas on writeback — no host-side slice copy.
    if n_pad != n_tok:
        ids_flat = jnp.pad(ids_flat, (0, n_pad - n_tok))
        pos_flat = jnp.pad(pos_flat, (0, n_pad - n_tok))

    # ---- fast path: both tables VMEM-resident ------------------------------
    if fast_path:
        vmem_est = (resident_tbl_bytes + 2 * T * H * o_it
                    + 4 * 2 * T * 4 + 4 * T * (V + P))
        cost = pl.CostEstimate(
            flops=2 * n_pad * H * (V + P), transcendentals=0,
            bytes_accessed=word_tbl_bytes + pos_tbl_bytes
            + n_tok * H * o_it + 2 * n_pad * 4)
        out = pl.pallas_call(
            _resident_kernel,
            out_shape=jax.ShapeDtypeStruct((n_tok, H), out_dtype),
            grid_spec=pltpu.PrefetchScalarGridSpec(
                num_scalar_prefetch=0,
                grid=(num_tiles,),
                in_specs=[
                    pl.BlockSpec((T, 1), lambda t: (t, 0)),    # token ids
                    pl.BlockSpec((T, 1), lambda t: (t, 0)),    # position ids
                    pl.BlockSpec((V, H), lambda t: (0, 0)),    # word table (resident)
                    pl.BlockSpec((P, H), lambda t: (0, 0)),    # pos table (resident)
                ],
                out_specs=pl.BlockSpec((T, H), lambda t: (t, 0)),
            ),
            compiler_params=pltpu.CompilerParams(
                # No cross-tile state -> fully parallel (v7x uses both TCs).
                dimension_semantics=("parallel",),
                vmem_limit_bytes=_vmem_limit(vmem_est, vmem_cap),
            ),
            cost_estimate=cost,
        )(ids_flat.reshape(n_pad, 1), pos_flat.reshape(n_pad, 1),
          word_emb, pos_emb)
        return out.reshape(B, S, H)

    # ---- gather path: word rows from HBM, position table VMEM-resident -----
    # TODO(synk): for very long B*S (>= ~64K tokens) the SMEM id array should be
    #             chunk-DMA'd from HBM per tile instead of scalar-prefetched.
    if pos_resident:
        kernel = functools.partial(_gather_kernel, tokens_per_tile=T)
        vmem_est = (pos_tbl_bytes + 2 * T * H * (w_it + o_it)
                    + 4 * T * 4 + 4 * T * P)
        cost = pl.CostEstimate(
            flops=2 * n_pad * H * P + n_pad * H, transcendentals=0,
            bytes_accessed=n_pad * H * w_it + pos_tbl_bytes
            + n_tok * H * o_it + 2 * n_pad * 4)
        out = pl.pallas_call(
            kernel,
            out_shape=jax.ShapeDtypeStruct((n_tok, H), out_dtype),
            grid_spec=pltpu.PrefetchScalarGridSpec(
                num_scalar_prefetch=1,                           # token ids -> SMEM
                grid=(num_tiles,),
                in_specs=[
                    pl.BlockSpec(memory_space=pl.ANY),           # word table (HBM)
                    pl.BlockSpec(memory_space=pl.ANY),           # pos table (HBM, copied once)
                    pl.BlockSpec((T, 1), lambda t, ids: (t, 0)),  # position ids
                ],
                out_specs=pl.BlockSpec((T, H), lambda t, ids: (t, 0)),
                scratch_shapes=[
                    pltpu.VMEM((2, T, H), word_emb.dtype),
                    pltpu.VMEM((P, H), pos_emb.dtype),
                    pltpu.SemaphoreType.DMA((2,)),
                    pltpu.SemaphoreType.DMA((1,)),
                ],
            ),
            compiler_params=pltpu.CompilerParams(
                # Cross-step double buffering (prime at t==0, prefetch t+1)
                # requires sequential tiles on one core.
                # TODO(synk): v7x dual-TC would need a per-core token split with
                #             per-core pipeline priming (core_parallel axis).
                dimension_semantics=("arbitrary",),
                vmem_limit_bytes=_vmem_limit(vmem_est, vmem_cap),
            ),
            cost_estimate=cost,
        )(ids_flat, word_emb, pos_emb, pos_flat.reshape(n_pad, 1))
        return out.reshape(B, S, H)

    # ---- fallback: position table too large for VMEM -> DMA-gather both ----
    kernel = functools.partial(_gather_pos_dma_kernel, tokens_per_tile=T)
    vmem_est = 2 * T * H * (w_it + p_it + o_it)
    cost = pl.CostEstimate(
        flops=n_pad * H, transcendentals=0,
        bytes_accessed=n_pad * H * (w_it + p_it + o_it) + 2 * n_pad * 4)
    out = pl.pallas_call(
        kernel,
        out_shape=jax.ShapeDtypeStruct((n_tok, H), out_dtype),
        grid_spec=pltpu.PrefetchScalarGridSpec(
            num_scalar_prefetch=2,                    # token + position ids -> SMEM
            grid=(num_tiles,),
            in_specs=[
                pl.BlockSpec(memory_space=pl.ANY),    # word table (HBM)
                pl.BlockSpec(memory_space=pl.ANY),    # pos table (HBM)
            ],
            out_specs=pl.BlockSpec((T, H), lambda t, ids, pos: (t, 0)),
            scratch_shapes=[
                pltpu.VMEM((2, T, H), word_emb.dtype),
                pltpu.VMEM((2, T, H), pos_emb.dtype),
                pltpu.SemaphoreType.DMA((2,)),
                pltpu.SemaphoreType.DMA((2,)),
            ],
        ),
        compiler_params=pltpu.CompilerParams(
            dimension_semantics=("arbitrary",),
            vmem_limit_bytes=_vmem_limit(vmem_est, vmem_cap),
        ),
        cost_estimate=cost,
    )(ids_flat, pos_flat, word_emb, pos_emb)
    return out.reshape(B, S, H)
    # TODO(synk): mpu.scatter_to_sequence_parallel_region is a multi-device
    #             sequence-parallel scatter; not applicable single-device.


if __name__ == "__main__":
    # Small, module-consistent shapes.
    vocab_size = 256
    hidden_size = 128
    max_sequence_length = 64
    B, S = 2, 64

    key = jax.random.PRNGKey(0)
    k_word, k_pos, k_ids = jax.random.split(key, 3)

    # init_method ~ normal(0, 0.02), applied deterministically in-script.
    word_embeddings = (0.02 * jax.random.normal(
        k_word, (vocab_size, hidden_size))).astype(jnp.float32)
    position_embeddings = (0.02 * jax.random.normal(
        k_pos, (max_sequence_length, hidden_size))).astype(jnp.float32)

    input_ids = jax.random.randint(k_ids, (B, S), 0, vocab_size, dtype=jnp.int32)
    position_ids = jnp.broadcast_to(jnp.arange(S, dtype=jnp.int32), (B, S))

    def reference(ids, pids, w, p):
        ref = w[ids] + MUP_RP_EMBEDDING_MULT * p[pids]
        if USE_MUP:
            ref = ref * MUP_EMBEDDING_MULT
        return ref

    # 1) Small-table fast path (both tables VMEM-resident, one-hot MXU gather).
    #    tokens_per_tile=32 -> 4 grid steps.
    out = embedding_forward(input_ids, position_ids,
                            word_embeddings, position_embeddings,
                            tokens_per_tile=32)
    out = jax.block_until_ready(out)
    ref = reference(input_ids, position_ids, word_embeddings, position_embeddings)
    assert out.shape == (B, S, hidden_size)
    # 1e-3 tolerance: the one-hot gather of an f32 table may round through the
    # MXU's bf16 path (<= ~4e-4 abs here); distinct rows differ by ~3e-2.
    assert jnp.allclose(out, ref, atol=1e-3, rtol=1e-3)

    # 2) Larger vocab exercises the HBM word-row gather path (double-buffered
    #    per-row DMAs, unrolled issue loop, VMEM-resident position table).
    big_vocab = 4096
    big_word = (0.02 * jax.random.normal(
        jax.random.PRNGKey(1), (big_vocab, hidden_size))).astype(jnp.float32)
    big_ids = jax.random.randint(jax.random.PRNGKey(2), (B, S), 0, big_vocab,
                                 dtype=jnp.int32)
    out2 = embedding_forward(big_ids, position_ids,
                             big_word, position_embeddings,
                             tokens_per_tile=32)
    out2 = jax.block_until_ready(out2)
    ref2 = reference(big_ids, position_ids, big_word, position_embeddings)
    assert jnp.allclose(out2, ref2, atol=1e-3, rtol=1e-3)

    print("KERNEL_OK")
</pallas_src>

<mosaic_0001>
module attributes {stable_mosaic.version = 11 : i64} {
  func.func @_resident_kernel(%arg0: i32, %arg1: memref<32x1xi32, #tpu.memory_space<vmem>>, %arg2: memref<32x1xi32, #tpu.memory_space<vmem>>, %arg3: memref<256x128xf32, #tpu.memory_space<vmem>>, %arg4: memref<64x128xf32, #tpu.memory_space<vmem>>, %arg5: memref<32x128xf32, #tpu.memory_space<vmem>>) attributes {dimension_semantics = [#tpu.dimension_semantics<parallel>], iteration_bounds = array<i64: 4>, scalar_prefetch = 0 : i64, scratch_operands = 0 : i64, tpu.core_type = #tpu.core_type<tc>, window_params = [{transform_indices = @transform_0, window_bounds = array<i64: 32, 1>}, {transform_indices = @transform_1, window_bounds = array<i64: 32, 1>}, {pipeline_mode = #tpu.pipeline_mode<synchronous>, transform_indices = @transform_2, window_bounds = array<i64: 256, 128>}, {pipeline_mode = #tpu.pipeline_mode<synchronous>, transform_indices = @transform_3, window_bounds = array<i64: 64, 128>}, {transform_indices = @transform_4, window_bounds = array<i64: 32, 128>}]} {
    %c0 = arith.constant 0 : index
    %c0_0 = arith.constant 0 : index
    %0 = vector.load %arg1[%c0, %c0_0] : memref<32x1xi32, #tpu.memory_space<vmem>>, vector<32x1xi32>
    %c0_1 = arith.constant 0 : index
    %c0_2 = arith.constant 0 : index
    %1 = vector.load %arg3[%c0_1, %c0_2] : memref<256x128xf32, #tpu.memory_space<vmem>>, vector<256x128xf32>
    %2 = tpu.iota {dimensions = array<i32: 1>} : vector<32x256xi32>
    %3 = vector.broadcast %0 : vector<32x1xi32> to vector<32x256xi32>
    %4 = arith.cmpi eq, %2, %3 : vector<32x256xi32>
    %5 = arith.extui %4 : vector<32x256xi1> to vector<32x256xi32>
    %6 = arith.sitofp %5 : vector<32x256xi32> to vector<32x256xf32>
    %cst = arith.constant dense<0.000000e+00> : vector<32x128xf32>
    %7 = tpu.matmul %6, %1, %cst {dimension_numbers = #tpu.dot_dimension_numbers<[1], [0], [0], [1], [0, 0, 1, 1], [], []>} : vector<32x256xf32>, vector<256x128xf32>, vector<32x128xf32> -> vector<32x128xf32>
    %c0_3 = arith.constant 0 : index
    %c0_4 = arith.constant 0 : index
    %8 = vector.load %arg2[%c0_3, %c0_4] : memref<32x1xi32, #tpu.memory_space<vmem>>, vector<32x1xi32>
    %c0_5 = arith.constant 0 : index
    %c0_6 = arith.constant 0 : index
    %9 = vector.load %arg4[%c0_5, %c0_6] : memref<64x128xf32, #tpu.memory_space<vmem>>, vector<64x128xf32>
    %10 = tpu.iota {dimensions = array<i32: 1>} : vector<32x64xi32>
    %11 = vector.broadcast %8 : vector<32x1xi32> to vector<32x64xi32>
    %12 = arith.cmpi eq, %10, %11 : vector<32x64xi32>
    %13 = arith.extui %12 : vector<32x64xi1> to vector<32x64xi32>
    %14 = arith.sitofp %13 : vector<32x64xi32> to vector<32x64xf32>
    %cst_7 = arith.constant dense<0.000000e+00> : vector<32x128xf32>
    %15 = tpu.matmul %14, %9, %cst_7 {dimension_numbers = #tpu.dot_dimension_numbers<[1], [0], [0], [1], [0, 0, 1, 1], [], []>} : vector<32x64xf32>, vector<64x128xf32>, vector<32x128xf32> -> vector<32x128xf32>
    %16 = arith.addf %7, %15 : vector<32x128xf32>
    %c0_8 = arith.constant 0 : index
    %c0_9 = arith.constant 0 : index
    %17 = vector.load %arg5[%c0_8, %c0_9] : memref<32x128xf32, #tpu.memory_space<vmem>>, vector<32x128xf32>
    tpu.vector_store %arg5[%c0_8, %c0_9], %16 {strides = array<i32>} : memref<32x128xf32, #tpu.memory_space<vmem>>, vector<32x128xf32>,
    return
  }
  func.func @transform_0(%arg0: i32) -> (i32, i32) {
    %c0_i32 = arith.constant 0 : i32
    %c0_i32_0 = arith.constant 0 : i32
    return %arg0, %c0_i32 : i32, i32
  }
  func.func @transform_1(%arg0: i32) -> (i32, i32) {
    %c0_i32 = arith.constant 0 : i32
    %c0_i32_0 = arith.constant 0 : i32
    return %arg0, %c0_i32 : i32, i32
  }
  func.func @transform_2(%arg0: i32) -> (i32, i32) {
    %c0_i32 = arith.constant 0 : i32
    %c0_i32_0 = arith.constant 0 : i32
    %c0_i32_1 = arith.constant 0 : i32
    return %c0_i32, %c0_i32_0 : i32, i32
  }
  func.func @transform_3(%arg0: i32) -> (i32, i32) {
    %c0_i32 = arith.constant 0 : i32
    %c0_i32_0 = arith.constant 0 : i32
    %c0_i32_1 = arith.constant 0 : i32
    return %c0_i32, %c0_i32_0 : i32, i32
  }
  func.func @transform_4(%arg0: i32) -> (i32, i32) {
    %c0_i32 = arith.constant 0 : i32
    %c0_i32_0 = arith.constant 0 : i32
    return %arg0, %c0_i32 : i32, i32
  }
}

</mosaic_0001>

<llo_original>
// kernel: tpu_custom_call.1
$region0: #{tpu_custom_call.1}
  #allocation0 [shape = 'u32[]', space=smem, size = 0x4, offset = 0x4, fixed_abs, tag = 'smem constant byte address 0x4 - core index']
  #allocation1 [shape = 'u32[144,128]{1,0:T(1,128)}', space=vmem, size = 0x12000, scoped, tag = 'internal scratch']
  %s0 = inlined_call_operand.vmem [shape: s32[128,1], index: 0, kind: input, shape index: {}]
  %s1 = inlined_call_operand.vmem [shape: s32[128,1], index: 1, kind: input, shape index: {}]
  %s2 = inlined_call_operand.vmem [shape: f32[256,128], index: 2, kind: input, shape index: {}]
  %s3 = inlined_call_operand.hbm [shape: f32[64,128], index: 3, kind: input, shape index: {}]
  %s4 = inlined_call_operand.hbm [shape: f32[128,128], index: 4, kind: output, shape index: {}]
  %s5 = sld [smem:[#allocation0]]
  $region53: #{tpu_custom_call.1} parent=0
    _
  %s7 = ssub.s32 1, %s5
  %s8 = scalar_select 0, %s7, %s5
  $region1: #{tpu_custom_call.1} parent=0
    #allocation2 [shape = 'u8[32768]{0}', space=vmem, size = 0x8000, scoped, tag = 'input window, operand 3, single buffered']
    #allocation3 [shape = 's32[2]{0}', space=sflag, size = 0x8, scoped, tag = 'scoped memory for tpu_custom_call.1']
    #allocation4 [shape = 's32[2]{0}', space=sflag, size = 0x8, scoped, tag = 'scoped memory for tpu_custom_call.1']
    #allocation5 [shape = 'u8[32768]{0}', space=vmem, size = 0x8000, scoped, tag = 'output window, operand 0']
    %9 = vsyncpa [#allocation3], 0
    %10 = vsyncpa [#allocation4], 0
    %s11 = scalar_lea.sflag [#allocation4], 1
    %12 = vsyncpa %s11, 0
    loop: start=0, step=1, limit=6
    $region2: #{tpu_custom_call.1} parent=1 // loop_pre_header
      _
    $region3: #{tpu_custom_call.1} parent=1 // loop_header
      %s14 = sphi 0, %s18
      %p15 = scmp.ge.s32.totalorder %s14, 6
      %s24 = sphi 0, %s26
      %s27 = sphi 0, %s24
      %s28 = sphi 0, %s27
      %s44 = sphi 0, %s28
      %s50 = sphi 0, %s52
      %s53 = sphi 0, %s50
      %s54 = sphi 0, %s53
      %s70 = sphi 0, %s54
      %s74 = sphi 0, %s74
      %s76 = sphi 0, %s74
      %s77 = sphi 0, %s76
      %s91 = sphi 0, %s77
      %s95 = sphi 0, %s95
      %s97 = sphi 0, %s95
      %s98 = sphi 0, %s97
      %s112 = sphi 0, %s98
      %s118 = sphi 0, %s120
      %s121 = sphi 0, %s118
      %s122 = sphi 0, %s121
      %s138 = sphi 0, %s122
    $region4: #{tpu_custom_call.1} parent=1 // loop_header_branch
      %17 = sbr.rel (%p15) target = $region8
    $region5: #{tpu_custom_call.1} parent=1 // loop_body
      %s19 = ssub.s32 %s14, 1
      %s20 = ssub.s32 %s14, 2
      %s21 = sadd.s32 %s14, 1
      %s22 = ssub.s32 %s14, %s21
      %p23 = scmp.eq.s32.totalorder %s22, 0
      %s25 = sadd.s32 %s24, 1
      %s26 = scalar_select %p23, %s24, %s25
      %p29 = pneg %p23
      %p30 = scmp.eq.s32.totalorder %s14, 3
      %p31 = por %p29, %p30
      %p32 = scmp.ne.s32.totalorder %s24, %s27
      %p33 = scmp.eq.s32.totalorder %s14, 0
      %p34 = por %p32, %p33
      %p35 = scmp.ne.s32.totalorder %s24, %s27
      %p36 = scmp.eq.s32.totalorder %s19, 3
      %p37 = por %p35, %p36
      %p38 = scmp.ne.s32.totalorder %s27, %s28
      %p39 = scmp.eq.s32.totalorder %s19, 0
      %p40 = por %p38, %p39
      %p41 = scmp.ne.s32.totalorder %s27, %s28
      %p42 = scmp.eq.s32.totalorder %s20, 3
      %p43 = por %p41, %p42
      %p45 = scmp.ne.s32.totalorder %s28, %s44
      %p46 = scmp.eq.s32.totalorder %s20, 0
      %p47 = por %p45, %p46
      %s48 = ssub.s32 %s14, %s21
      %p49 = scmp.eq.s32.totalorder %s48, 0
      %s51 = sadd.s32 %s50, 1
      %s52 = scalar_select %p49, %s50, %s51
      %p55 = pneg %p49
      %p56 = scmp.eq.s32.totalorder %s14, 3
      %p57 = por %p55, %p56
      %p58 = scmp.ne.s32.totalorder %s50, %s53
      %p59 = scmp.eq.s32.totalorder %s14, 0
      %p60 = por %p58, %p59
      %p61 = scmp.ne.s32.totalorder %s50, %s53
      %p62 = scmp.eq.s32.totalorder %s19, 3
      %p63 = por %p61, %p62
      %p64 = scmp.ne.s32.totalorder %s53, %s54
      %p65 = scmp.eq.s32.totalorder %s19, 0
      %p66 = por %p64, %p65
      %p67 = scmp.ne.s32.totalorder %s53, %s54
      %p68 = scmp.eq.s32.totalorder %s20, 3
      %p69 = por %p67, %p68
      %p71 = scmp.ne.s32.totalorder %s54, %s70
      %p72 = scmp.eq.s32.totalorder %s20, 0
      %p73 = por %p71, %p72
      %s75 = sadd.s32 %s74, 1
      %p78 = scmp.eq.s32.totalorder %s14, 3
      %p79 = scmp.ne.s32.totalorder %s74, %s76
      %p80 = scmp.eq.s32.totalorder %s14, 0
      %p81 = por %p79, %p80
      %p82 = scmp.ne.s32.totalorder %s74, %s76
      %p83 = scmp.eq.s32.totalorder %s19, 3
      %p84 = por %p82, %p83
      %p85 = scmp.ne.s32.totalorder %s76, %s77
      %p86 = scmp.eq.s32.totalorder %s19, 0
      %p87 = por %p85, %p86
      %p88 = scmp.ne.s32.totalorder %s76, %s77
      %p89 = scmp.eq.s32.totalorder %s20, 3
      %p90 = por %p88, %p89
      %p92 = scmp.ne.s32.totalorder %s77, %s91
      %p93 = scmp.eq.s32.totalorder %s20, 0
      %p94 = por %p92, %p93
      %s96 = sadd.s32 %s95, 1
      %p99 = scmp.eq.s32.totalorder %s14, 3
      %p100 = scmp.ne.s32.totalorder %s95, %s97
      %p101 = scmp.eq.s32.totalorder %s14, 0
      %p102 = por %p100, %p101
      %p103 = scmp.ne.s32.totalorder %s95, %s97
      %p104 = scmp.eq.s32.totalorder %s19, 3
      %p105 = por %p103, %p104
      %p106 = scmp.ne.s32.totalorder %s97, %s98
      %p107 = scmp.eq.s32.totalorder %s19, 0
      %p108 = por %p106, %p107
      %p109 = scmp.ne.s32.totalorder %s97, %s98
      %p110 = scmp.eq.s32.totalorder %s20, 3
      %p111 = por %p109, %p110
      %p113 = scmp.ne.s32.totalorder %s98, %s112
      %p114 = scmp.eq.s32.totalorder %s20, 0
      %p115 = por %p113, %p114
      %s116 = ssub.s32 %s14, %s21
      %p117 = scmp.eq.s32.totalorder %s116, 0
      %s119 = sadd.s32 %s118, 1
      %s120 = scalar_select %p117, %s118, %s119
      %p123 = pneg %p117
      %p124 = scmp.eq.s32.totalorder %s14, 3
      %p125 = por %p123, %p124
      %p126 = scmp.ne.s32.totalorder %s118, %s121
      %p127 = scmp.eq.s32.totalorder %s14, 0
      %p128 = por %p126, %p127
      %p129 = scmp.ne.s32.totalorder %s118, %s121
      %p130 = scmp.eq.s32.totalorder %s19, 3
      %p131 = por %p129, %p130
      %p132 = scmp.ne.s32.totalorder %s121, %s122
      %p133 = scmp.eq.s32.totalorder %s19, 0
      %p134 = por %p132, %p133
      %p135 = scmp.ne.s32.totalorder %s121, %s122
      %p136 = scmp.eq.s32.totalorder %s20, 3
      %p137 = por %p135, %p136
      %p139 = scmp.ne.s32.totalorder %s122, %s138
      %p140 = scmp.eq.s32.totalorder %s20, 0
      %p141 = por %p139, %p140
      %p142 = scmp.le.s32.totalorder 1, %s14
      %p143 = scmp.lt.s32.totalorder %s14, 5
      %p144 = pnand %p142, %p143
      %p145 = pneg %p144
      // Predicated region
      $region9: #{tpu_custom_call.1} parent=5 // pred_check
        _
      $region10: #{tpu_custom_call.1} parent=5 // pred_check_branch
        %147 = sbr.rel (%p144) target = $region12
      $region11: #{tpu_custom_call.1} parent=5 // pred_region
        %s148 = ssub.s32 %s14, 1
        // Predicated region
        $region13: #{tpu_custom_call.1} parent=11 // pred_check
          %p149 = pneg %p87
        $region14: #{tpu_custom_call.1} parent=11 // pred_check_branch
          %151 = sbr.rel (%p149) target = $region16
        $region15: #{tpu_custom_call.1} parent=11 // pred_region
          _
        $region16: #{tpu_custom_call.1} parent=11 // pred_fallthru
          _
        // Predicated region
        $region17: #{tpu_custom_call.1} parent=11 // pred_check
          %p152 = pneg %p108
        $region18: #{tpu_custom_call.1} parent=11 // pred_check_branch
          %154 = sbr.rel (%p152) target = $region20
        $region19: #{tpu_custom_call.1} parent=11 // pred_region
          %s156 = ssub.s32 1024, 1024
          %157 = vsyncadd [#allocation3], %s156
          %s158 = sshll.u32 [#allocation2], 4
          %s159 = int_to_ptr.vmem [resolvable:$true] %s158
          %164 = dma.hbm_to_vmem [thread:$0]  %s3, 1024, %s159, [#allocation3], 128, 128, 8
        $region20: #{tpu_custom_call.1} parent=11 // pred_fallthru
          _
      $region12: #{tpu_custom_call.1} parent=5 // pred_fallthru
        _
      %p165 = scmp.lt.s32.totalorder %s14, 4
      // Predicated region
      $region21: #{tpu_custom_call.1} parent=5 // pred_check
        %p166 = pneg %p165
      $region22: #{tpu_custom_call.1} parent=5 // pred_check_branch
        %168 = sbr.rel (%p166) target = $region24
      $region23: #{tpu_custom_call.1} parent=5 // pred_region
        // Predicated region
        $region25: #{tpu_custom_call.1} parent=23 // pred_check
          %p169 = pneg %p34
        $region26: #{tpu_custom_call.1} parent=23 // pred_check_branch
          %171 = sbr.rel (%p169) target = $region28
        $region27: #{tpu_custom_call.1} parent=23 // pred_region
          %s172 = smul.u32 4, %s14
          %p173 = scmp.lt.s32.totalorder %s172, 15
          %s174 = scalar_select %p173, %s172, 15
          %s175 = smul.addr %s174, 8
          %s176 = scalar_lea.vmem %s0, %s175
          %s177 = smul.u32 4, %s14
        $region28: #{tpu_custom_call.1} parent=23 // pred_fallthru
          _
        // Predicated region
        $region29: #{tpu_custom_call.1} parent=23 // pred_check
          %p178 = pneg %p60
        $region30: #{tpu_custom_call.1} parent=23 // pred_check_branch
          %180 = sbr.rel (%p178) target = $region32
        $region31: #{tpu_custom_call.1} parent=23 // pred_region
          %s181 = smul.u32 4, %s14
          %p182 = scmp.lt.s32.totalorder %s181, 15
          %s183 = scalar_select %p182, %s181, 15
          %s184 = smul.addr %s183, 8
          %s185 = scalar_lea.vmem %s1, %s184
          %s186 = smul.u32 4, %s14
        $region32: #{tpu_custom_call.1} parent=23 // pred_fallthru
          _
      $region24: #{tpu_custom_call.1} parent=5 // pred_fallthru
        _
      %p187 = scmp.le.s32.totalorder 1, %s14
      %p188 = scmp.lt.s32.totalorder %s14, 5
      %p189 = pnand %p187, %p188
      %p190 = pneg %p189
      // Predicated region
      $region33: #{tpu_custom_call.1} parent=5 // pred_check
        _
      $region34: #{tpu_custom_call.1} parent=5 // pred_check_branch
        %192 = sbr.rel (%p189) target = $region36
      $region35: #{tpu_custom_call.1} parent=5 // pred_region
        %s193 = ssub.s32 %s14, 1
        // Predicated region
        $region37: #{tpu_custom_call.1} parent=35 // pred_check
          %p194 = pneg %p108
        $region38: #{tpu_custom_call.1} parent=35 // pred_check_branch
          %196 = sbr.rel (%p194) target = $region40
        $region39: #{tpu_custom_call.1} parent=35 // pred_region
          %197 = dma.done [#allocation3], 1024
        $region40: #{tpu_custom_call.1} parent=35 // pred_fallthru
          _
        %s198 = smul.u32 4, %s19
        %p199 = scmp.lt.s32.totalorder %s198, 15
        %s200 = scalar_select %p199, %s198, 15
        %s201 = smul.addr %s200, 8
        %s202 = scalar_lea.vmem %s0, %s201
        %p203 = pneg %p40
        %p204 = pneg %p37
        %s205 = smul.u32 4, %s19
        %p206 = scmp.lt.s32.totalorder %s205, 15
        %s207 = scalar_select %p206, %s205, 15
        %s208 = smul.addr %s207, 8
        %s209 = scalar_lea.vmem %s1, %s208
        %p210 = pneg %p66
        %p211 = pneg %p63
        %p212 = pneg %p87
        %p213 = pneg %p84
        %p214 = pneg %p108
        %p215 = pneg %p105
        %p216 = pneg %p134
        %p217 = pneg %p131
        %s218 = sand.u32 %s121, 1
        %s219 = scalar_lea.sflag [#allocation4], %s218
        %s220 = sand.u32 %s121, 1
        %s221 = smul.addr %s220, 32
        %s222 = scalar_lea.vmem [#allocation5], %s221
        %s223 = smul.u32 4, %s19
        %p224 = scmp.lt.s32.totalorder %s223, 15
        %s225 = scalar_select %p224, %s223, 15
        %s226 = smul.addr %s225, 8
        %s227 = scalar_lea.vmem %s0, %s226
        %s228 = smul.u32 4, %s19
        %s229 = smul.u32 4, %s19
        %p230 = scmp.lt.s32.totalorder %s229, 15
        %s231 = scalar_select %p230, %s229, 15
        %s232 = smul.addr %s231, 8
        %s233 = scalar_lea.vmem %s1, %s232
        %s234 = smul.u32 4, %s19
        %s235 = smul.u32 4, %s19
        %v236 = vld [vmem:[%s227] sm:$0xff]
        %v237 = vld [vmem:[%s227 + $0x8] sm:$0xff]
        %v238 = vld [vmem:[%s227 + $0x10] sm:$0xff]
        %v239 = vld [vmem:[%s227 + $0x18] sm:$0xff]
        %v240 = vld [vmem:[%s2] sm:$0xff]
        %v241 = vld [vmem:[%s2 + $0x8] sm:$0xff]
        %v242 = vld [vmem:[%s2 + $0x10] sm:$0xff]
        %v243 = vld [vmem:[%s2 + $0x18] sm:$0xff]
        %v244 = vld [vmem:[%s2 + $0x20] sm:$0xff]
        %v245 = vld [vmem:[%s2 + $0x28] sm:$0xff]
        %v246 = vld [vmem:[%s2 + $0x30] sm:$0xff]
        %v247 = vld [vmem:[%s2 + $0x38] sm:$0xff]
        %v248 = vld [vmem:[%s2 + $0x40] sm:$0xff]
        %v249 = vld [vmem:[%s2 + $0x48] sm:$0xff]
        %v250 = vld [vmem:[%s2 + $0x50] sm:$0xff]
        %v251 = vld [vmem:[%s2 + $0x58] sm:$0xff]
        %v252 = vld [vmem:[%s2 + $0x60] sm:$0xff]
        %v253 = vld [vmem:[%s2 + $0x68] sm:$0xff]
        %v254 = vld [vmem:[%s2 + $0x70] sm:$0xff]
        %v255 = vld [vmem:[%s2 + $0x78] sm:$0xff]
        %v256 = vld [vmem:[%s2 + $0x80] sm:$0xff]
        %v257 = vld [vmem:[%s2 + $0x88] sm:$0xff]
        %v258 = vld [vmem:[%s2 + $0x90] sm:$0xff]
        %v259 = vld [vmem:[%s2 + $0x98] sm:$0xff]
        %v260 = vld [vmem:[%s2 + $0xa0] sm:$0xff]
        %v261 = vld [vmem:[%s2 + $0xa8] sm:$0xff]
        %v262 = vld [vmem:[%s2 + $0xb0] sm:$0xff]
        %v263 = vld [vmem:[%s2 + $0xb8] sm:$0xff]
        %v264 = vld [vmem:[%s2 + $0xc0] sm:$0xff]
        %v265 = vld [vmem:[%s2 + $0xc8] sm:$0xff]
        %v266 = vld [vmem:[%s2 + $0xd0] sm:$0xff]
        %v267 = vld [vmem:[%s2 + $0xd8] sm:$0xff]
        %v268 = vld [vmem:[%s2 + $0xe0] sm:$0xff]
        %v269 = vld [vmem:[%s2 + $0xe8] sm:$0xff]
        %v270 = vld [vmem:[%s2 + $0xf0] sm:$0xff]
        %v271 = vld [vmem:[%s2 + $0xf8] sm:$0xff]
        %v272 = vlaneseq
        %v273 = vand.u32 %v272, 127
        %v274 = vadd.s32 %v273, 128
        %275 = vset.pattern.permute.xlu0 0
        %276 = vperm.xlu0 %275, %v236
        %v277 = vpop.permute.xlu0 %276
        %278 = vset.pattern.permute.xlu0 0
        %279 = vperm.xlu0 %278, %v237
        %v280 = vpop.permute.xlu0 %279
        %281 = vset.pattern.permute.xlu0 0
        %282 = vperm.xlu0 %281, %v238
        %v283 = vpop.permute.xlu0 %282
        %284 = vset.pattern.permute.xlu0 0
        %285 = vperm.xlu0 %284, %v239
        %v286 = vpop.permute.xlu0 %285
        %vm287 = vcmp.eq.s32.totalorder %v273, %v277
        %vm288 = vcmp.eq.s32.totalorder %v274, %v277
        %vm289 = vcmp.eq.s32.totalorder %v273, %v280
        %vm290 = vcmp.eq.s32.totalorder %v274, %v280
        %vm291 = vcmp.eq.s32.totalorder %v273, %v283
        %vm292 = vcmp.eq.s32.totalorder %v274, %v283
        %vm293 = vcmp.eq.s32.totalorder %v273, %v286
        %vm294 = vcmp.eq.s32.totalorder %v274, %v286
        %v295 = vsel %vm287, 1, 0
        %v296 = vsel %vm288, 1, 0
        %v297 = vsel %vm289, 1, 0
        %v298 = vsel %vm290, 1, 0
        %v299 = vsel %vm291, 1, 0
        %v300 = vsel %vm292, 1, 0
        %v301 = vsel %vm293, 1, 0
        %v302 = vsel %vm294, 1, 0
        %v303 = vcvt.s32.f32 %v295
        %v304 = vcvt.s32.f32 %v296
        %v305 = vcvt.s32.f32 %v297
        %v306 = vcvt.s32.f32 %v298
        %v307 = vcvt.s32.f32 %v299
        %v308 = vcvt.s32.f32 %v300
        %v309 = vcvt.s32.f32 %v301
        %v310 = vcvt.s32.f32 %v302
        %v311 = vld [vmem:[%s233] sm:$0xff]
        %v312 = vld [vmem:[%s233 + $0x8] sm:$0xff]
        %v313 = vld [vmem:[%s233 + $0x10] sm:$0xff]
        %v314 = vld [vmem:[%s233 + $0x18] sm:$0xff]
        %v315 = vld [vmem:[#allocation2] sm:$0xff]
        %v316 = vld [vmem:[#allocation2 + $0x8] sm:$0xff]
        %v317 = vld [vmem:[#allocation2 + $0x10] sm:$0xff]
        %v318 = vld [vmem:[#allocation2 + $0x18] sm:$0xff]
        %v319 = vld [vmem:[#allocation2 + $0x20] sm:$0xff]
        %v320 = vld [vmem:[#allocation2 + $0x28] sm:$0xff]
        %v321 = vld [vmem:[#allocation2 + $0x30] sm:$0xff]
        %v322 = vld [vmem:[#allocation2 + $0x38] sm:$0xff]
        %323 = vset.pattern.permute.xlu0 0
        %324 = vperm.xlu0 %323, %v311
        %v325 = vpop.permute.xlu0 %324
        %326 = vset.pattern.permute.xlu0 0
        %327 = vperm.xlu0 %326, %v312
        %v328 = vpop.permute.xlu0 %327
        %329 = vset.pattern.permute.xlu0 0
        %330 = vperm.xlu0 %329, %v313
        %v331 = vpop.permute.xlu0 %330
        %332 = vset.pattern.permute.xlu0 0
        %333 = vperm.xlu0 %332, %v314
        %v334 = vpop.permute.xlu0 %333
        %vm335 = vcmp.eq.s32.totalorder %v273, %v325
        %vm336 = vcmp.eq.s32.totalorder %v273, %v328
        %vm337 = vcmp.eq.s32.totalorder %v273, %v331
        %vm338 = vcmp.eq.s32.totalorder %v273, %v334
        %v339 = vsel %vm335, 1, 0
        %v340 = vsel %vm336, 1, 0
        %v341 = vsel %vm337, 1, 0
        %v342 = vsel %vm338, 1, 0
        %v343 = vcvt.s32.f32 %v339
        %v344 = vcvt.s32.f32 %v340
        %v345 = vcvt.s32.f32 %v341
        %v346 = vcvt.s32.f32 %v342
        %vm347 = vcmask 523264
        %v349 = vsel %vm347, %v343, 0
        %v352 = vsel %vm347, %v344, 0
        %v355 = vsel %vm347, %v345, 0
        %v358 = vsel %vm347, %v346, 0
        %360 = vmatprep.subr.mxu0 0.0
        %361 = vmatpush1.msra.mxu0 %v315
        %362 = vmatprep.subr.mxu0 0.0
        %363 = vmatpush1.msra.mxu0 %v316
        %364 = vmatprep.subr.mxu0 0.0
        %365 = vmatpush1.msra.mxu0 %v317
        %366 = vmatprep.subr.mxu0 0.0
        %367 = vmatpush1.msra.mxu0 %v318
        %368 = vmatprep.subr.mxu0 0.0
        %369 = vmatpush1.msra.mxu0 %v319
        %370 = vmatprep.subr.mxu0 0.0
        %371 = vmatpush1.msra.mxu0 %v320
        %372 = vmatprep.subr.mxu0 0.0
        %373 = vmatpush1.msra.mxu0 %v321
        %374 = vmatprep.subr.mxu0 0.0
        %375 = vmatpush1.msra.mxu0 %v322
        %376 = vmatprep.subr.mxu0 0.0
        %377 = vmatpush1.msra.mxu0 0.0
        %378 = vmatprep.subr.mxu0 0.0
        %379 = vmatpush1.msra.mxu0 0.0
        %380 = vmatprep.subr.mxu0 0.0
        %381 = vmatpush1.msra.mxu0 0.0
        %382 = vmatprep.subr.mxu0 0.0
        %383 = vmatpush1.msra.mxu0 0.0
        %384 = vmatprep.subr.mxu0 0.0
        %385 = vmatpush1.msra.mxu0 0.0
        %386 = vmatprep.subr.mxu0 0.0
        %387 = vmatpush1.msra.mxu0 0.0
        %388 = vmatprep.subr.mxu0 0.0
        %389 = vmatpush1.msra.mxu0 0.0
        %390 = vmatprep.subr.mxu0 0.0
        %391 = vmatpush1.msra.mxu0 0.0
        %392 = vmatprep.subr.mxu0 0.0
        %393 = vmatpush1.msra.mxu0 0.0
        %394 = vmatprep.subr.mxu0 0.0
        %395 = vmatpush1.msra.mxu0 0.0
        %396 = vmatprep.subr.mxu0 0.0
        %397 = vmatpush1.msra.mxu0 0.0
        %398 = vmatprep.subr.mxu0 0.0
        %399 = vmatpush1.msra.mxu0 0.0
        %400 = vmatprep.subr.mxu0 0.0
        %401 = vmatpush1.msra.mxu0 0.0
        %402 = vmatprep.subr.mxu0 0.0
        %403 = vmatpush1.msra.mxu0 0.0
        %404 = vmatprep.subr.mxu0 0.0
        %405 = vmatpush1.msra.mxu0 0.0
        %406 = vmatprep.subr.mxu0 0.0
        %407 = vmatpush1.msra.mxu0 0.0
        %408 = vmatprep.subr.mxu0 0.0
        %409 = vmatpush1.msra.mxu0 0.0
        %410 = vmatprep.subr.mxu0 0.0
        %411 = vmatpush1.msra.mxu0 0.0
        %412 = vmatprep.subr.mxu0 0.0
        %413 = vmatpush1.msra.mxu0 0.0
        %414 = vmatprep.subr.mxu0 0.0
        %415 = vmatpush1.msra.mxu0 0.0
        %416 = vmatprep.subr.mxu0 0.0
        %417 = vmatpush1.msra.mxu0 0.0
        %418 = vmatprep.subr.mxu0 0.0
        %419 = vmatpush1.msra.mxu0 0.0
        %420 = vmatprep.subr.mxu0 0.0
        %421 = vmatpush1.msra.mxu0 0.0
        %422 = vmatprep.subr.mxu0 0.0
        %423 = vmatpush1.msra.mxu0 0.0
        %424 = vmatprep.mubr.f32.mxu0 0.0
        %425 = vmatmul.mubr.f32.gmra.mrb[0].mxu0 %v349
        %v426 = vpop.f32.mrb[0].mxu0
        %v427 = vadd.f32 0.0, %v426
        %v428 = vpop.f32.mrb[0].mxu0
        %429 = vmatprep.mubr.f32.mxu0 0.0
        %430 = vmatmul.mubr.f32.gmra.mrb[0].mxu0 %v352
        %v431 = vpop.f32.mrb[0].mxu0
        %v432 = vadd.f32 0.0, %v431
        %v433 = vpop.f32.mrb[0].mxu0
        %434 = vmatprep.mubr.f32.mxu0 0.0
        %435 = vmatmul.mubr.f32.gmra.mrb[0].mxu0 %v355
        %v436 = vpop.f32.mrb[0].mxu0
        %v437 = vadd.f32 0.0, %v436
        %v438 = vpop.f32.mrb[0].mxu0
        %439 = vmatprep.mubr.f32.mxu0 0.0
        %440 = vmatmul.mubr.f32.gmra.mrb[0].mxu0 %v358
        %v441 = vpop.f32.mrb[0].mxu0
        %v442 = vadd.f32 0.0, %v441
        %v443 = vpop.f32.mrb[0].mxu0
        %444 = vdwg.mxu0
        %445 = vmatprep.subr.mxu0 0.0
        %446 = vmatpush1.msra.mxu0 %v240
        %447 = vmatprep.subr.mxu0 0.0
        %448 = vmatpush1.msra.mxu0 %v241
        %449 = vmatprep.subr.mxu0 0.0
        %450 = vmatpush1.msra.mxu0 %v242
        %451 = vmatprep.subr.mxu0 0.0
        %452 = vmatpush1.msra.mxu0 %v243
        %453 = vmatprep.subr.mxu0 0.0
        %454 = vmatpush1.msra.mxu0 %v244
        %455 = vmatprep.subr.mxu0 0.0
        %456 = vmatpush1.msra.mxu0 %v245
        %457 = vmatprep.subr.mxu0 0.0
        %458 = vmatpush1.msra.mxu0 %v246
        %459 = vmatprep.subr.mxu0 0.0
        %460 = vmatpush1.msra.mxu0 %v247
        %461 = vmatprep.subr.mxu0 0.0
        %462 = vmatpush1.msra.mxu0 %v248
        %463 = vmatprep.subr.mxu0 0.0
        %464 = vmatpush1.msra.mxu0 %v249
        %465 = vmatprep.subr.mxu0 0.0
        %466 = vmatpush1.msra.mxu0 %v250
        %467 = vmatprep.subr.mxu0 0.0
        %468 = vmatpush1.msra.mxu0 %v251
        %469 = vmatprep.subr.mxu0 0.0
        %470 = vmatpush1.msra.mxu0 %v252
        %471 = vmatprep.subr.mxu0 0.0
        %472 = vmatpush1.msra.mxu0 %v253
        %473 = vmatprep.subr.mxu0 0.0
        %474 = vmatpush1.msra.mxu0 %v254
        %475 = vmatprep.subr.mxu0 0.0
        %476 = vmatpush1.msra.mxu0 %v255
        %477 = vmatprep.subr.mxu0 0.0
        %478 = vmatpush1.msra.mxu0 %v256
        %479 = vmatprep.subr.mxu0 0.0
        %480 = vmatpush1.msra.mxu0 %v257
        %481 = vmatprep.subr.mxu0 0.0
        %482 = vmatpush1.msra.mxu0 %v258
        %483 = vmatprep.subr.mxu0 0.0
        %484 = vmatpush1.msra.mxu0 %v259
        %485 = vmatprep.subr.mxu0 0.0
        %486 = vmatpush1.msra.mxu0 %v260
        %487 = vmatprep.subr.mxu0 0.0
        %488 = vmatpush1.msra.mxu0 %v261
        %489 = vmatprep.subr.mxu0 0.0
        %490 = vmatpush1.msra.mxu0 %v262
        %491 = vmatprep.subr.mxu0 0.0
        %492 = vmatpush1.msra.mxu0 %v263
        %493 = vmatprep.subr.mxu0 0.0
        %494 = vmatpush1.msra.mxu0 %v264
        %495 = vmatprep.subr.mxu0 0.0
        %496 = vmatpush1.msra.mxu0 %v265
        %497 = vmatprep.subr.mxu0 0.0
        %498 = vmatpush1.msra.mxu0 %v266
        %499 = vmatprep.subr.mxu0 0.0
        %500 = vmatpush1.msra.mxu0 %v267
        %501 = vmatprep.subr.mxu0 0.0
        %502 = vmatpush1.msra.mxu0 %v268
        %503 = vmatprep.subr.mxu0 0.0
        %504 = vmatpush1.msra.mxu0 %v269
        %505 = vmatprep.subr.mxu0 0.0
        %506 = vmatpush1.msra.mxu0 %v270
        %507 = vmatprep.subr.mxu0 0.0
        %508 = vmatpush1.msra.mxu0 %v271
        %509 = vmatprep.mubr.f32.mxu0 %v304
        %510 = vmatmul.mubr.f32.gmra.mrb[0].mxu0 %v303
        %v511 = vpop.f32.mrb[0].mxu0
        %v512 = vadd.f32 %v427, %v511
        %v513 = vpop.f32.mrb[0].mxu0
        %514 = vmatprep.mubr.f32.mxu0 %v306
        %515 = vmatmul.mubr.f32.gmra.mrb[0].mxu0 %v305
        %v516 = vpop.f32.mrb[0].mxu0
        %v517 = vadd.f32 %v432, %v516
        %v518 = vpop.f32.mrb[0].mxu0
        %519 = vmatprep.mubr.f32.mxu0 %v308
        %520 = vmatmul.mubr.f32.gmra.mrb[0].mxu0 %v307
        %v521 = vpop.f32.mrb[0].mxu0
        %v522 = vadd.f32 %v437, %v521
        %v523 = vpop.f32.mrb[0].mxu0
        %524 = vmatprep.mubr.f32.mxu0 %v310
        %525 = vmatmul.mubr.f32.gmra.mrb[0].mxu0 %v309
        %v526 = vpop.f32.mrb[0].mxu0
        %v527 = vadd.f32 %v442, %v526
        %v528 = vpop.f32.mrb[0].mxu0
        %529 = vdwg.mxu0
        %530 = vst [vmem:[%s222] sm:$0xff] %v512
        %531 = vst [vmem:[%s222 + $0x8] sm:$0xff] %v517
        %532 = vst [vmem:[%s222 + $0x10] sm:$0xff] %v522
        %533 = vst [vmem:[%s222 + $0x18] sm:$0xff] %v527
        %s534 = sand.u32 %s121, 1
        %s535 = scalar_lea.sflag [#allocation4], %s534
        %s536 = sand.u32 %s121, 1
        %s537 = smul.addr %s536, 32
        %s538 = scalar_lea.vmem [#allocation5], %s537
        // Predicated region
        $region41: #{tpu_custom_call.1} parent=35 // pred_check
          %p539 = pneg %p131
        $region42: #{tpu_custom_call.1} parent=35 // pred_check_branch
          %541 = sbr.rel (%p539) target = $region44
        $region43: #{tpu_custom_call.1} parent=35 // pred_region
          %s542 = smul.u32 4, %s19
          %s544 = ssub.s32 512, 512
          %545 = vsyncadd %s535, %s544
          %s546 = smul.addr %s542, 128
          %s547 = scalar_lea.hbm %s4, %s546
          %s548 = sshll.u32 %s538, 4
          %s549 = int_to_ptr.vmem [resolvable:$true] %s548
          %554 = dma.vmem_to_hbm [thread:$0]  %s549, 512, %s547, %s535, 128, 128, 8
        $region44: #{tpu_custom_call.1} parent=35 // pred_fallthru
          _
      $region36: #{tpu_custom_call.1} parent=5 // pred_fallthru
        _
      %p555 = scmp.le.s32.totalorder 2, %s14
      // Predicated region
      $region45: #{tpu_custom_call.1} parent=5 // pred_check
        %p556 = pneg %p555
      $region46: #{tpu_custom_call.1} parent=5 // pred_check_branch
        %558 = sbr.rel (%p556) target = $region48
      $region47: #{tpu_custom_call.1} parent=5 // pred_region
        %s559 = ssub.s32 %s14, 2
        // Predicated region
        $region49: #{tpu_custom_call.1} parent=47 // pred_check
          %p560 = pneg %p137
        $region50: #{tpu_custom_call.1} parent=47 // pred_check_branch
          %562 = sbr.rel (%p560) target = $region52
        $region51: #{tpu_custom_call.1} parent=47 // pred_region
          %s563 = sand.u32 %s122, 1
          %s564 = scalar_lea.sflag [#allocation4], %s563
          %s565 = sand.u32 %s122, 1
          %s566 = smul.addr %s565, 32
          %s567 = scalar_lea.vmem [#allocation5], %s566
          %568 = dma.done %s564, 512
        $region52: #{tpu_custom_call.1} parent=47 // pred_fallthru
          _
      $region48: #{tpu_custom_call.1} parent=5 // pred_fallthru
        _
    $region6: #{tpu_custom_call.1} parent=1 // loop_footer
      %s18 = sadd.s32 1, %s14
    $region7: #{tpu_custom_call.1} parent=1 // loop_footer_branch
      %13 = sbr.rel target = $region3
    $region8: #{tpu_custom_call.1} parent=1 // loop_exit
      _
    %569 = vsyncpa [#allocation3], 1
    %s570 = scalar_lea.sflag [#allocation3], 1
    %571 = vsyncpa %s570, 1
    %572 = vsyncpa [#allocation4], 1
    %s573 = scalar_lea.sflag [#allocation4], 1
    %574 = vsyncpa %s573, 1

</llo_original>
